<compile_context>
chip_gen: v5e
topology: v5e:2x2
jax: 0.10.0
libtpu: 0.0.40
codegen_flags: <defaults>
</compile_context>

<pallas_src>
import functools

import jax
import jax.numpy as jnp
from jax import lax
from jax.experimental import pallas as pl
from jax.experimental.pallas import tpu as pltpu

DEFAULT_EPS = 1e-8


def _round_up(x: int, m: int) -> int:
    return ((x + m - 1) // m) * m


def _vmem_params() -> tuple[int, int]:
    """(tile working-set budget, vmem_limit_bytes), generation-aware."""
    cap = 64 * 1024 * 1024  # v7x-safe fallback (smallest VMEM per TC)
    try:
        info = pltpu.get_tpu_info()
        c = getattr(info, "vmem_capacity_bytes", None)
        if c:
            cap = int(c)
    except Exception:
        pass
    budget = int(cap * 0.40)
    limit = int(cap * 0.75)
    return budget, limit


def _pick_tiles(n: int, m: int, d: int, in_itemsize: int, out_itemsize: int,
                budget: int) -> tuple[int, int, int]:
    """Pick (TN, TM, TK).  TK == d means the feature dim is not tiled."""
    tn = min(_round_up(max(n, 1), 8), 256)       # sublane-aligned
    tm = min(_round_up(max(m, 1), 128), 256)     # lane-dense output

    def est(tn_, tm_, tk_):
        inputs = 2 * (tn_ + tm_) * tk_ * in_itemsize   # double-buffered cs/ds tiles
        inputs += 2 * (tn_ + tm_) * 4                  # inv_a / inv_b side inputs
        outputs = 2 * tn_ * tm_ * out_itemsize         # double-buffered out tile
        outputs += tn_ * tm_ * 4                       # f32 accumulator scratch
        return inputs + outputs

    # 1) Keep D un-tiled if the working set fits; otherwise tile it (K axis).
    if est(tn, tm, d) <= budget:
        tk = d
    else:
        fixed = 2 * tn * tm * out_itemsize + tn * tm * 4 + 2 * (tn + tm) * 4
        avail = budget - fixed
        tk_max = avail // (2 * (tn + tm) * in_itemsize) if avail > 0 else 0
        tk = max(128, (tk_max // 128) * 128)
        tk = min(tk, _round_up(d, 128))
        if tk >= d:
            tk = d

    # 2) If still over budget (extreme shapes), shrink TM before TN (TN is the
    #    ds HBM-reuse lever, keep it large as long as possible).
    while est(tn, tm, tk) > budget and (tm > 128 or tn > 8):
        if tm > 128:
            tm = max(128, ((tm // 2) // 128) * 128)
        else:
            tn = max(8, ((tn // 2) // 8) * 8)

    # 3) Grow TN while the budget allows (cuts ds re-streams ~linearly).
    tn_cap = min(512, _round_up(max(n, 1), 8))
    while tn < tn_cap:
        cand = min(tn * 2, tn_cap)
        if est(cand, tm, tk) > budget:
            break
        tn = cand

    return tn, tm, tk


def _cosine_kernel(cs_ref, ds_ref, inv_a_ref, inv_b_ref, out_ref, acc_ref):
    k = pl.program_id(2)

    @pl.when(k == 0)
    def _():
        acc_ref[...] = jnp.zeros_like(acc_ref)

    # cs_tile @ ds_tile.T without an explicit transpose: contract the last
    # (feature) dim of both operands directly on the MXU, f32 accumulation.
    acc_ref[...] += lax.dot_general(
        cs_ref[...], ds_ref[...],
        dimension_numbers=(((1,), (1,)), ((), ())),
        preferred_element_type=jnp.float32,
    )

    @pl.when(k == pl.num_programs(2) - 1)
    def _():
        # Epilogue: precomputed inverse norms, row- and column-broadcast.
        out_ref[...] = (
            1.0 - acc_ref[...] * inv_a_ref[...] * inv_b_ref[...]
        ).astype(out_ref.dtype)


def _inv_norm(x: jax.Array, eps: float) -> jax.Array:
    """1 / clamp_min(||x||_2, eps) over the last dim, keepdim, f32, exact."""
    x32 = x.astype(jnp.float32)
    nrm = jnp.sqrt(jnp.sum(x32 * x32, axis=-1, keepdims=True))
    return 1.0 / jnp.maximum(nrm, jnp.float32(eps))


def cosine_distance(cs: jax.Array, ds: jax.Array, eps: float = DEFAULT_EPS,
                    out_dtype=jnp.float32) -> jax.Array:
    """Pallas TPU implementation of 1 - CosineSimilarity(cs, ds) -> (N, M)."""
    assert cs.ndim == 2 and ds.ndim == 2 and cs.shape[1] == ds.shape[1]
    n, d = cs.shape
    m, _ = ds.shape

    budget, vmem_limit = _vmem_params()
    tn, tm, tk = _pick_tiles(n, m, d, jnp.dtype(cs.dtype).itemsize,
                             jnp.dtype(out_dtype).itemsize, budget)

    # Inverse norms: a single cheap fused XLA reduction pass each, exact divide
    # (clamp-to-eps before the reciprocal -> padded zero rows stay finite).
    inv_a = _inv_norm(cs, eps)                    # (n, 1) f32
    inv_b = _inv_norm(ds, eps).reshape(1, m)      # (1, m) f32

    m_pad = _round_up(m, tm)                      # lane-dense output columns
    d_pad = d if tk == d else _round_up(d, tk)    # only padded when K-tiling

    cs_p, ds_p, inv_b_p = cs, ds, inv_b
    if d_pad != d:
        cs_p = jnp.pad(cs_p, ((0, 0), (0, d_pad - d)))
        ds_p = jnp.pad(ds_p, ((0, 0), (0, d_pad - d)))
    if m_pad != m:
        ds_p = jnp.pad(ds_p, ((0, m_pad - m), (0, 0)))
        inv_b_p = jnp.pad(inv_b_p, ((0, 0), (0, m_pad - m)), constant_values=1.0)

    grid = (pl.cdiv(n, tn), m_pad // tm, d_pad // tk)

    out = pl.pallas_call(
        _cosine_kernel,
        out_shape=jax.ShapeDtypeStruct((n, m_pad), out_dtype),
        grid_spec=pltpu.PrefetchScalarGridSpec(
            num_scalar_prefetch=0,
            grid=grid,
            in_specs=[
                pl.BlockSpec((tn, tk), lambda i, j, k: (i, k)),   # cs tile
                pl.BlockSpec((tm, tk), lambda i, j, k: (j, k)),   # ds tile
                pl.BlockSpec((tn, 1), lambda i, j, k: (i, 0)),    # inv_a column
                pl.BlockSpec((1, tm), lambda i, j, k: (0, j)),    # inv_b row
            ],
            out_specs=pl.BlockSpec((tn, tm), lambda i, j, k: (i, j)),
            scratch_shapes=[pltpu.VMEM((tn, tm), jnp.float32)],
        ),
        compiler_params=pltpu.CompilerParams(
            dimension_semantics=("parallel", "parallel", "arbitrary"),
            vmem_limit_bytes=vmem_limit,
        ),
    )(cs_p, ds_p, inv_a, inv_b_p)

    return out[:, :m]


class Cosine:
    """Mirror of the PyTorch `Cosine(FieldCost)` module.

    Picks a single field from the two dicts (with optional column selection)
    and returns the (N, M) cosine-distance cost matrix.
    """

    def __init__(self, field: str, select=None, eps: float = DEFAULT_EPS):
        self.field = field
        self.select = list(select) if select is not None else []
        self.eps = eps

    def get_field(self, cs_dict, ds_dict):
        ts_field = cs_dict[self.field]
        ds_field = ds_dict[self.field]
        if len(self.select) > 0:
            sel = jnp.asarray(self.select, dtype=jnp.int32)
            ts_field = ts_field[:, sel]
            ds_field = ds_field[:, sel]
        return ts_field, ds_field

    def __call__(self, cs_dict, ds_dict):
        ts_field, ds_field = self.get_field(cs_dict, ds_dict)
        return cosine_distance(ts_field, ds_field, self.eps)


def _reference(a, b, eps):
    a = a.astype(jnp.float32)
    b = b.astype(jnp.float32)
    a_n = jnp.linalg.norm(a, axis=-1, keepdims=True)
    b_n = jnp.linalg.norm(b, axis=-1, keepdims=True)
    a = a / jnp.maximum(a_n, eps)
    b = b / jnp.maximum(b_n, eps)
    return 1.0 - a @ b.T


if __name__ == "__main__":
    key = jax.random.PRNGKey(0)
    k1, k2, k3, k4 = jax.random.split(key, 4)

    # Exact (non-approx) inverse norms are now used; the remaining tolerance
    # covers the default MXU matmul precision path for f32 operands.
    ATOL = RTOL = 2e-3

    # Case 1: tiny demo shapes (N=M=8, D=32) — exercises output lane padding.
    N1, M1, D1 = 8, 8, 32
    cs1 = jax.random.normal(k1, (N1, D1), dtype=jnp.float32)
    ds1 = jax.random.normal(k2, (M1, D1), dtype=jnp.float32)
    cost_mod = Cosine(field="embedding", eps=DEFAULT_EPS)
    out1 = jax.block_until_ready(cost_mod({"embedding": cs1}, {"embedding": ds1}))
    ref1 = _reference(cs1, ds1, DEFAULT_EPS)
    assert out1.shape == (N1, M1)
    assert jnp.allclose(out1, ref1, atol=ATOL, rtol=RTOL), "case1 mismatch vs reference"

    # Case 2: non-aligned N / M (+ an all-zero row to exercise the eps clamp).
    N2, M2, D2 = 72, 150, 96
    cs2 = jax.random.normal(k3, (N2, D2), dtype=jnp.float32)
    cs2 = cs2.at[3].set(0.0)
    ds2 = jax.random.normal(k4, (M2, D2), dtype=jnp.float32)
    out2 = jax.block_until_ready(cosine_distance(cs2, ds2, DEFAULT_EPS))
    ref2 = _reference(cs2, ds2, DEFAULT_EPS)
    assert out2.shape == (N2, M2)
    assert jnp.allclose(out2, ref2, atol=ATOL, rtol=RTOL), "case2 mismatch vs reference"

    print("KERNEL_OK")
</pallas_src>

<mosaic_0001>
module attributes {stable_mosaic.version = 11 : i64} {
  func.func @_cosine_kernel(%arg0: i32, %arg1: i32, %arg2: i32, %arg3: memref<8x32xf32, #tpu.memory_space<vmem>>, %arg4: memref<128x32xf32, #tpu.memory_space<vmem>>, %arg5: memref<8x1xf32, #tpu.memory_space<vmem>>, %arg6: memref<1x128xf32, #tpu.memory_space<vmem>>, %arg7: memref<8x128xf32, #tpu.memory_space<vmem>>, %arg8: memref<8x128xf32, #tpu.memory_space<vmem>>) attributes {dimension_semantics = [#tpu.dimension_semantics<parallel>, #tpu.dimension_semantics<parallel>, #tpu.dimension_semantics<arbitrary>], iteration_bounds = array<i64: 1, 1, 1>, scalar_prefetch = 0 : i64, scratch_operands = 1 : i64, tpu.core_type = #tpu.core_type<tc>, window_params = [{transform_indices = @transform_0, window_bounds = array<i64: 8, 32>}, {transform_indices = @transform_1, window_bounds = array<i64: 128, 32>}, {transform_indices = @transform_2, window_bounds = array<i64: 8, 1>}, {transform_indices = @transform_3, window_bounds = array<i64: 1, 128>}, {transform_indices = @transform_4, window_bounds = array<i64: 8, 128>}]} {
    %c0_i32 = arith.constant 0 : i32
    %0 = arith.cmpi eq, %arg2, %c0_i32 : i32
    %1 = arith.extui %0 : i1 to i32
    %c0_i32_0 = arith.constant 0 : i32
    %2 = arith.cmpi ne, %1, %c0_i32_0 : i32
    scf.if %2 {
      %cst_10 = arith.constant 0.000000e+00 : f32
      %12 = vector.broadcast %cst_10 : f32 to vector<8x128xf32>
      %c0_11 = arith.constant 0 : index
      %c0_12 = arith.constant 0 : index
      %13 = vector.load %arg8[%c0_11, %c0_12] : memref<8x128xf32, #tpu.memory_space<vmem>>, vector<8x128xf32>
      tpu.vector_store %arg8[%c0_11, %c0_12], %12 {strides = array<i32>} : memref<8x128xf32, #tpu.memory_space<vmem>>, vector<8x128xf32>,
    } else {
    }
    %c0 = arith.constant 0 : index
    %c0_1 = arith.constant 0 : index
    %3 = vector.load %arg8[%c0, %c0_1] : memref<8x128xf32, #tpu.memory_space<vmem>>, vector<8x128xf32>
    %c0_2 = arith.constant 0 : index
    %c0_3 = arith.constant 0 : index
    %4 = vector.load %arg3[%c0_2, %c0_3] : memref<8x32xf32, #tpu.memory_space<vmem>>, vector<8x32xf32>
    %c0_4 = arith.constant 0 : index
    %c0_5 = arith.constant 0 : index
    %5 = vector.load %arg4[%c0_4, %c0_5] : memref<128x32xf32, #tpu.memory_space<vmem>>, vector<128x32xf32>
    %cst = arith.constant dense<0.000000e+00> : vector<8x128xf32>
    %6 = tpu.matmul %4, %5, %cst {dimension_numbers = #tpu.dot_dimension_numbers<[1], [1], [0], [0], [0, 0, 1, 0], [], []>} : vector<8x32xf32>, vector<128x32xf32>, vector<8x128xf32> -> vector<8x128xf32>
    %7 = arith.addf %3, %6 : vector<8x128xf32>
    %c0_6 = arith.constant 0 : index
    %c0_7 = arith.constant 0 : index
    %8 = vector.load %arg8[%c0_6, %c0_7] : memref<8x128xf32, #tpu.memory_space<vmem>>, vector<8x128xf32>
    tpu.vector_store %arg8[%c0_6, %c0_7], %7 {strides = array<i32>} : memref<8x128xf32, #tpu.memory_space<vmem>>, vector<8x128xf32>,
    %c0_i32_8 = arith.constant 0 : i32
    %9 = arith.cmpi eq, %arg2, %c0_i32_8 : i32
    %10 = arith.extui %9 : i1 to i32
    %c0_i32_9 = arith.constant 0 : i32
    %11 = arith.cmpi ne, %10, %c0_i32_9 : i32
    scf.if %11 {
      %c0_10 = arith.constant 0 : index
      %c0_11 = arith.constant 0 : index
      %12 = vector.load %arg8[%c0_10, %c0_11] : memref<8x128xf32, #tpu.memory_space<vmem>>, vector<8x128xf32>
      %c0_12 = arith.constant 0 : index
      %c0_13 = arith.constant 0 : index
      %13 = vector.load %arg5[%c0_12, %c0_13] : memref<8x1xf32, #tpu.memory_space<vmem>>, vector<8x1xf32>
      %14 = vector.broadcast %13 : vector<8x1xf32> to vector<8x128xf32>
      %15 = arith.mulf %12, %14 : vector<8x128xf32>
      %c0_14 = arith.constant 0 : index
      %c0_15 = arith.constant 0 : index
      %16 = vector.load %arg6[%c0_14, %c0_15] : memref<1x128xf32, #tpu.memory_space<vmem>>, vector<1x128xf32>
      %17 = vector.broadcast %16 : vector<1x128xf32> to vector<8x128xf32>
      %18 = arith.mulf %15, %17 : vector<8x128xf32>
      %cst_16 = arith.constant 1.000000e+00 : f32
      %19 = vector.broadcast %cst_16 : f32 to vector<8x128xf32>
      %20 = arith.subf %19, %18 : vector<8x128xf32>
      %c0_17 = arith.constant 0 : index
      %c0_18 = arith.constant 0 : index
      %21 = vector.load %arg7[%c0_17, %c0_18] : memref<8x128xf32, #tpu.memory_space<vmem>>, vector<8x128xf32>
      tpu.vector_store %arg7[%c0_17, %c0_18], %20 {strides = array<i32>} : memref<8x128xf32, #tpu.memory_space<vmem>>, vector<8x128xf32>,
    } else {
    }
    return
  }
  func.func @transform_0(%arg0: i32, %arg1: i32, %arg2: i32) -> (i32, i32) {
    %c0_i32 = arith.constant 0 : i32
    return %arg0, %arg2 : i32, i32
  }
  func.func @transform_1(%arg0: i32, %arg1: i32, %arg2: i32) -> (i32, i32) {
    %c0_i32 = arith.constant 0 : i32
    return %arg1, %arg2 : i32, i32
  }
  func.func @transform_2(%arg0: i32, %arg1: i32, %arg2: i32) -> (i32, i32) {
    %c0_i32 = arith.constant 0 : i32
    %c0_i32_0 = arith.constant 0 : i32
    return %arg0, %c0_i32 : i32, i32
  }
  func.func @transform_3(%arg0: i32, %arg1: i32, %arg2: i32) -> (i32, i32) {
    %c0_i32 = arith.constant 0 : i32
    %c0_i32_0 = arith.constant 0 : i32
    return %c0_i32, %arg1 : i32, i32
  }
  func.func @transform_4(%arg0: i32, %arg1: i32, %arg2: i32) -> (i32, i32) {
    %c0_i32 = arith.constant 0 : i32
    return %arg0, %arg1 : i32, i32
  }
}

</mosaic_0001>

<llo_original>
// kernel: tpu_custom_call.1
$region0: #{tpu_custom_call.1}
  #allocation0 [shape = 'u32[]', space=smem, size = 0x4, offset = 0x4, fixed_abs, tag = 'smem constant byte address 0x4 - core index']
  #allocation1 [shape = 'u32[72,128]{1,0:T(1,128)}', space=vmem, size = 0x9000, scoped, tag = 'internal scratch']
  #allocation2 [shape = 'f32[8,128]{1,0:T(8,128)}', space=vmem, size = 0x1000, scoped, tag = 'scratch operand']
  %s0 = inlined_call_operand.vmem [shape: f32[8,32], index: 0, kind: input, shape index: {}]
  %s1 = inlined_call_operand.vmem [shape: f32[128,32], index: 1, kind: input, shape index: {}]
  %s2 = inlined_call_operand.vmem [shape: f32[8,1], index: 2, kind: input, shape index: {}]
  %s3 = inlined_call_operand.vmem [shape: f32[1,128], index: 3, kind: input, shape index: {}]
  %s4 = inlined_call_operand.hbm [shape: f32[8,128], index: 4, kind: output, shape index: {}]
  %s5 = sld [smem:[#allocation0]]
  $region34: #{tpu_custom_call.1} parent=0
    _
  %s7 = ssub.s32 1, %s5
  %s8 = scalar_select 0, %s7, %s5
  $region1: #{tpu_custom_call.1} parent=0
    #allocation3 [shape = 'u8[4096]{0}', space=vmem, size = 0x1000, scoped, tag = 'output window, operand 0, single buffered']
    #allocation4 [shape = 's32[1]{0}', space=sflag, size = 0x4, scoped, tag = 'scoped memory for tpu_custom_call.1']
    %9 = vsyncpa [#allocation4], 0
    // Predicated region
    $region2: #{tpu_custom_call.1} parent=1 // pred_check
      _
    $region3: #{tpu_custom_call.1} parent=1 // pred_check_branch
      %11 = sbr.rel (0) target = $region5
    $region4: #{tpu_custom_call.1} parent=1 // pred_region
      _
    $region5: #{tpu_custom_call.1} parent=1 // pred_fallthru
      _
    // Predicated region
    $region6: #{tpu_custom_call.1} parent=1 // pred_check
      _
    $region7: #{tpu_custom_call.1} parent=1 // pred_check_branch
      %13 = sbr.rel (0) target = $region9
    $region8: #{tpu_custom_call.1} parent=1 // pred_region
      _
    $region9: #{tpu_custom_call.1} parent=1 // pred_fallthru
      _
    // Predicated region
    $region10: #{tpu_custom_call.1} parent=1 // pred_check
      _
    $region11: #{tpu_custom_call.1} parent=1 // pred_check_branch
      %15 = sbr.rel (0) target = $region13
    $region12: #{tpu_custom_call.1} parent=1 // pred_region
      _
    $region13: #{tpu_custom_call.1} parent=1 // pred_fallthru
      _
    // Predicated region
    $region14: #{tpu_custom_call.1} parent=1 // pred_check
      _
    $region15: #{tpu_custom_call.1} parent=1 // pred_check_branch
      %17 = sbr.rel (0) target = $region17
    $region16: #{tpu_custom_call.1} parent=1 // pred_region
      _
    $region17: #{tpu_custom_call.1} parent=1 // pred_fallthru
      _
    %p18 = scmp.eq.s32.totalorder 0, 0
    // Predicated region
    $region18: #{tpu_custom_call.1} parent=1 // pred_check
      %p19 = pneg %p18
    $region19: #{tpu_custom_call.1} parent=1 // pred_check_branch
      %21 = sbr.rel (%p19) target = $region21
    $region20: #{tpu_custom_call.1} parent=1 // pred_region
      %22 = vst [vmem:[#allocation2] sm:$0xff] 0.0
    $region21: #{tpu_custom_call.1} parent=1 // pred_fallthru
      _
    %v23 = vld [vmem:[#allocation2] sm:$0xff]
    %v24 = vld [vmem:[%s0] sm:$0xff]
    %v25 = vld [vmem:[%s1] sm:$0xff]
    %v26 = vld [vmem:[%s1 + $0x8] sm:$0xff]
    %v27 = vld [vmem:[%s1 + $0x10] sm:$0xff]
    %v28 = vld [vmem:[%s1 + $0x18] sm:$0xff]
    %v29 = vld [vmem:[%s1 + $0x20] sm:$0xff]
    %v30 = vld [vmem:[%s1 + $0x28] sm:$0xff]
    %v31 = vld [vmem:[%s1 + $0x30] sm:$0xff]
    %v32 = vld [vmem:[%s1 + $0x38] sm:$0xff]
    %v33 = vld [vmem:[%s1 + $0x40] sm:$0xff]
    %v34 = vld [vmem:[%s1 + $0x48] sm:$0xff]
    %v35 = vld [vmem:[%s1 + $0x50] sm:$0xff]
    %v36 = vld [vmem:[%s1 + $0x58] sm:$0xff]
    %v37 = vld [vmem:[%s1 + $0x60] sm:$0xff]
    %v38 = vld [vmem:[%s1 + $0x68] sm:$0xff]
    %v39 = vld [vmem:[%s1 + $0x70] sm:$0xff]
    %v40 = vld [vmem:[%s1 + $0x78] sm:$0xff]
    %vm41 = vcmask 261120
    %v43 = vsel %vm41, %v24, 0
    %v46 = vsel %vm41, %v25, 0
    %v49 = vsel %vm41, %v26, 0
    %v52 = vsel %vm41, %v27, 0
    %v55 = vsel %vm41, %v28, 0
    %v58 = vsel %vm41, %v29, 0
    %v61 = vsel %vm41, %v30, 0
    %v64 = vsel %vm41, %v31, 0
    %v67 = vsel %vm41, %v32, 0
    %v70 = vsel %vm41, %v33, 0
    %v73 = vsel %vm41, %v34, 0
    %v76 = vsel %vm41, %v35, 0
    %v79 = vsel %vm41, %v36, 0
    %v82 = vsel %vm41, %v37, 0
    %v85 = vsel %vm41, %v38, 0
    %v88 = vsel %vm41, %v39, 0
    %v91 = vsel %vm41, %v40, 0
    %93 = vmatpush.xpose.msra.mxu0 %v91
    %94 = vmatpush.xpose.msra.mxu0 %v88
    %95 = vmatpush.xpose.msra.mxu0 %v85
    %96 = vmatpush.xpose.msra.mxu0 %v82
    %97 = vmatpush.xpose.msra.mxu0 %v79
    %98 = vmatpush.xpose.msra.mxu0 %v76
    %99 = vmatpush.xpose.msra.mxu0 %v73
    %100 = vmatpush.xpose.msra.mxu0 %v70
    %101 = vmatpush.xpose.msra.mxu0 %v67
    %102 = vmatpush.xpose.msra.mxu0 %v64
    %103 = vmatpush.xpose.msra.mxu0 %v61
    %104 = vmatpush.xpose.msra.mxu0 %v58
    %105 = vmatpush.xpose.msra.mxu0 %v55
    %106 = vmatpush.xpose.msra.mxu0 %v52
    %107 = vmatpush.xpose.msra.mxu0 %v49
    %108 = vmatpush.xpose.msra.mxu0 %v46
    %109 = vmatmul.f32.gmra.mxu0 %v43
    %v110 = vpop.f32.mrf.mxu0
    %v111 = vadd.f32 0.0, %v110
    %112 = vdwg.mxu0
    %v113 = vadd.f32 %v23, %v111
    %114 = vst [vmem:[#allocation2] sm:$0xff] %v113
    // Predicated region
    $region22: #{tpu_custom_call.1} parent=1 // pred_check
      %p115 = pneg %p18
    $region23: #{tpu_custom_call.1} parent=1 // pred_check_branch
      %117 = sbr.rel (%p115) target = $region25
    $region24: #{tpu_custom_call.1} parent=1 // pred_region
      %v118 = vld [vmem:[#allocation2] sm:$0xff]
      %v119 = vld [vmem:[%s2] sm:$0xff]
      %121 = vset.pattern.permute.xlu0 0
      %122 = vperm.xlu0 %121, %v119
      %v123 = vpop.permute.xlu0 %122
      %v125 = vmul.f32 %v118, %v123
      %v126 = vld [vmem:[%s3] sm:$0x1]
      %v128 = vperm.slane %v126, 0
      %v130 = vmul.f32 %v125, %v128
      %v131 = vsub.f32 1.0, %v130
      %132 = vst [vmem:[#allocation3] sm:$0xff] %v131
    $region25: #{tpu_custom_call.1} parent=1 // pred_fallthru
      _
    // Predicated region
    $region26: #{tpu_custom_call.1} parent=1 // pred_check
      _
    $region27: #{tpu_custom_call.1} parent=1 // pred_check_branch
      %134 = sbr.rel (0) target = $region29
    $region28: #{tpu_custom_call.1} parent=1 // pred_region
      %136 = vsyncadd [#allocation4], 0
      %s138 = sshll.u32 [#allocation3], 4
      %s139 = int_to_ptr.vmem [resolvable:$true] %s138
      %s140 = sshll.u32 %s4, 4
      %s141 = int_to_ptr.hbm [resolvable:$true] %s140
      %143 = dma.vmem_to_hbm [thread:$0]  %s139, 128, %s141, [#allocation4]
    $region29: #{tpu_custom_call.1} parent=1 // pred_fallthru
      _
    // Predicated region
    $region30: #{tpu_custom_call.1} parent=1 // pred_check
      _
    $region31: #{tpu_custom_call.1} parent=1 // pred_check_branch
      %145 = sbr.rel (0) target = $region33
    $region32: #{tpu_custom_call.1} parent=1 // pred_region
      %147 = dma.done [#allocation4], 128
    $region33: #{tpu_custom_call.1} parent=1 // pred_fallthru
      _
    %148 = vsyncpa [#allocation4], 1

</llo_original>
